<compile_context>
chip_gen: v7x
topology: tpu7x:2x2x1
jax: 0.10.0
libtpu: 0.0.40
codegen_flags: <defaults>
</compile_context>

<pallas_src>
import functools
import math

import jax
import jax.numpy as jnp
from jax.experimental import pallas as pl
from jax.experimental.pallas import tpu as pltpu

EPS = 1e-5


def _budgets():
    """Returns (fast-path x-bytes threshold, vmem_limit_bytes, streaming tile budget)."""
    try:
        cap = getattr(pltpu.get_tpu_info(), "vmem_capacity_bytes", None)
    except Exception:
        cap = None
    if cap is None:
        cap = 64 * 1024 * 1024                       # conservative: v7x per-TensorCore
    if cap >= 100 * 1024 * 1024:                     # v5e / v6e: 128 MiB physical VMEM
        return 12 * 1024 * 1024, 96 * 1024 * 1024, 4 * 1024 * 1024
    return 6 * 1024 * 1024, 48 * 1024 * 1024, 4 * 1024 * 1024


# ----------------------------- small-problem fast path -----------------------------
def _small_bn_kernel(x_ref, gamma_ref, beta_ref, o_ref):
    # Whole (N, E) block resident in VMEM; two-pass variance; affine folded into scale.
    x = x_ref[...].astype(jnp.float32)
    mean = jnp.mean(x, axis=0, keepdims=True)
    diff = x - mean
    var = jnp.mean(diff * diff, axis=0, keepdims=True)          # biased, like BN training
    scale = gamma_ref[...].astype(jnp.float32) * jax.lax.rsqrt(var + EPS)
    o_ref[...] = (diff * scale + beta_ref[...].astype(jnp.float32)).astype(o_ref.dtype)


# ----------------------------- tiled streaming path -----------------------------
def _stats_kernel(x_ref, mean_ref, m2_ref, *, tile_n, n_rows):
    """Phase A: streaming per-lane (mean, M2) with Chan's parallel combine.

    The last tile may be ragged; Pallas does NOT zero-fill partial input blocks, so the
    out-of-range rows are masked explicitly (avoids a jnp.pad copy of x in HBM).
    """
    i = pl.program_id(0)

    @pl.when(i == 0)
    def _init():
        mean_ref[...] = jnp.zeros_like(mean_ref)
        m2_ref[...] = jnp.zeros_like(m2_ref)

    rem = n_rows - i * tile_n                              # valid rows left (>= 1)
    n_b = jnp.minimum(rem, tile_n).astype(jnp.float32)     # rows in this tile
    n_a = (i * tile_n).astype(jnp.float32)                 # rows already folded in

    valid = jax.lax.broadcasted_iota(jnp.int32, x_ref.shape, 0) < rem
    x = x_ref[...].astype(jnp.float32)

    tile_sum = jnp.sum(jnp.where(valid, x, 0.0), axis=0, keepdims=True)
    tile_mean = tile_sum / n_b
    diff = jnp.where(valid, x - tile_mean, 0.0)
    tile_m2 = jnp.sum(diff * diff, axis=0, keepdims=True)

    # Chan combine with the running (mean, M2) held in the resident output blocks.
    delta = tile_mean - mean_ref[...]
    n_ab = n_a + n_b
    mean_ref[...] += delta * (n_b / n_ab)
    m2_ref[...] += tile_m2 + (delta * delta) * (n_a * n_b / n_ab)


def _normalize_kernel(x_ref, scale_ref, shift_ref, o_ref):
    """Phase B: y = x * scale + shift (folded affine)."""
    o_ref[...] = (x_ref[...].astype(jnp.float32) * scale_ref[...]
                  + shift_ref[...]).astype(o_ref.dtype)


def _pick_tile_n(n_rows, lanes, budget_bytes):
    row_bytes = 4 * lanes
    t_big = max(8, (budget_bytes // row_bytes) // 8 * 8)          # ~budget-sized f32 tile
    t_knee = max(8, ((2 * 1024 * 1024) // row_bytes) // 8 * 8)    # ~2 MiB roofline knee
    t_bal = max(8, (-(-n_rows // 8)) // 8 * 8)                    # aim for >= 8 tiles (v7x)
    t = min(t_big, max(t_knee, t_bal))
    n_up = -(-n_rows // 8) * 8
    return max(8, min(t, n_up))


def normalization_batch(x, gamma, beta, *, small_bytes=None, tile_n=None):
    """Pallas equivalent of Normalization(embed_dim, 'batch').forward(x).

    x: (B, S, E); gamma, beta: (E,) BatchNorm affine.  Returns x's shape/dtype.
    small_bytes / tile_n are test overrides (None -> auto, generation-aware).
    """
    B, S, E = x.shape
    N = B * S
    auto_small, vmem_limit, tile_budget = _budgets()
    if small_bytes is None:
        small_bytes = auto_small

    x2 = x.reshape(N, E)
    g2 = gamma.reshape(1, E).astype(jnp.float32)
    b2 = beta.reshape(1, E).astype(jnp.float32)

    # ---- small/medium problems: single resident block, one HBM read of x ----
    if N * E * 4 <= small_bytes:
        out = pl.pallas_call(
            _small_bn_kernel,
            out_shape=jax.ShapeDtypeStruct((N, E), x.dtype),
            in_specs=[pl.BlockSpec((N, E), lambda: (0, 0)),
                      pl.BlockSpec((1, E), lambda: (0, 0)),
                      pl.BlockSpec((1, E), lambda: (0, 0))],
            out_specs=pl.BlockSpec((N, E), lambda: (0, 0)),
            compiler_params=pltpu.CompilerParams(vmem_limit_bytes=vmem_limit),
        )(x2, g2, b2)
        return out.reshape(B, S, E)

    # ---- streaming two-phase path ----
    # Lane-dense repack: fold k rows into lanes when E < 128 (free row-major reshape).
    k = 1
    if E < 128 and 128 % E == 0 and N % (128 // E) == 0:
        k = 128 // E
    rows, lanes = N // k, k * E
    xs = x2.reshape(rows, lanes) if k > 1 else x2

    tn = tile_n if tile_n is not None else _pick_tile_n(rows, lanes, tile_budget)
    tn = max(8, min(tn, -(-rows // 8) * 8))
    n_tiles = -(-rows // tn)

    # Phase A: per-lane running (mean, M2); the grid axis is a reduction ("arbitrary").
    mean_l, m2_l = pl.pallas_call(
        functools.partial(_stats_kernel, tile_n=tn, n_rows=rows),
        out_shape=(jax.ShapeDtypeStruct((1, lanes), jnp.float32),
                   jax.ShapeDtypeStruct((1, lanes), jnp.float32)),
        grid=(n_tiles,),
        in_specs=[pl.BlockSpec((tn, lanes), lambda i: (i, 0))],
        out_specs=(pl.BlockSpec((1, lanes), lambda i: (0, 0)),
                   pl.BlockSpec((1, lanes), lambda i: (0, 0))),
        compiler_params=pltpu.CompilerParams(
            dimension_semantics=("arbitrary",),
            vmem_limit_bytes=vmem_limit),
    )(xs)

    # Tiny JAX epilogue: combine the k lane replicas per feature, fold the affine.
    if k > 1:
        mean_k = mean_l.reshape(k, E)
        m2_k = m2_l.reshape(k, E)
        mean = jnp.mean(mean_k, axis=0, keepdims=True)                    # equal counts
        m2 = (jnp.sum(m2_k, axis=0, keepdims=True)
              + rows * jnp.sum((mean_k - mean) ** 2, axis=0, keepdims=True))
    else:
        mean, m2 = mean_l, m2_l
    var = m2 / N                                                           # biased
    scale = g2 * jax.lax.rsqrt(var + EPS)                                  # (1, E)
    shift = b2 - mean * scale                                              # (1, E)
    if k > 1:
        scale = jnp.tile(scale, (1, k))                                    # packed layout
        shift = jnp.tile(shift, (1, k))

    # Phase B: elementwise normalize; independent tiles -> "parallel" (both TCs on v7x).
    # The ragged last output block is clipped by Pallas -> no trailing slice needed.
    out = pl.pallas_call(
        _normalize_kernel,
        out_shape=jax.ShapeDtypeStruct((rows, lanes), x.dtype),
        grid=(n_tiles,),
        in_specs=[pl.BlockSpec((tn, lanes), lambda i: (i, 0)),
                  pl.BlockSpec((1, lanes), lambda i: (0, 0)),
                  pl.BlockSpec((1, lanes), lambda i: (0, 0))],
        out_specs=pl.BlockSpec((tn, lanes), lambda i: (i, 0)),
        compiler_params=pltpu.CompilerParams(
            dimension_semantics=("parallel",),
            vmem_limit_bytes=vmem_limit),
    )(xs, scale, shift)

    return out.reshape(B, S, E)


# ----------------------------- reference & test -----------------------------
def _reference(x, gamma, beta):
    B, S, E = x.shape
    x2 = x.reshape(B * S, E).astype(jnp.float32)
    mean = jnp.mean(x2, axis=0, keepdims=True)
    var = jnp.mean((x2 - mean) ** 2, axis=0, keepdims=True)   # biased, like BN training
    y = (x2 - mean) / jnp.sqrt(var + EPS) * gamma + beta
    return y.reshape(B, S, E).astype(x.dtype)


def _make_inputs(key, B, S, E):
    kx, kg, kb = jax.random.split(key, 3)
    x = jax.random.normal(kx, (B, S, E), dtype=jnp.float32)
    # Parameter init mirroring the module's __init__: uniform(-1/sqrt(E), 1/sqrt(E)).
    stdv = 1.0 / math.sqrt(E)
    gamma = jax.random.uniform(kg, (E,), minval=-stdv, maxval=stdv, dtype=jnp.float32)
    beta = jax.random.uniform(kb, (E,), minval=-stdv, maxval=stdv, dtype=jnp.float32)
    return x, gamma, beta


if __name__ == "__main__":
    key = jax.random.PRNGKey(0)
    k0, k1, k2 = jax.random.split(key, 3)

    # Module-default-ish small shape (batch=2, graph_size=8, embed_dim=32): fast path.
    x, g, b = _make_inputs(k0, 2, 8, 32)
    out = jax.block_until_ready(normalization_batch(x, g, b))
    assert out.shape == x.shape
    assert jnp.allclose(out, _reference(x, g, b), atol=1e-5, rtol=1e-5), \
        "fast-path mismatch vs reference"

    # Force the streaming path with small overrides so the test stays cheap:
    # (a) E < 128 -> lane-dense repack (k=4); tile_n=128 gives a ragged last tile that
    #     exercises the in-kernel row masking and partial-output clipping.
    x, g, b = _make_inputs(k1, 4, 520, 32)        # N = 2080 rows -> 520 packed rows
    out = jax.block_until_ready(normalization_batch(x, g, b, small_bytes=0, tile_n=128))
    assert out.shape == x.shape
    assert jnp.allclose(out, _reference(x, g, b), atol=1e-4, rtol=1e-4), \
        "streaming (repacked) path mismatch vs reference"

    # (b) E >= 128 -> no repack; ragged last tile again.
    x, g, b = _make_inputs(k2, 4, 260, 256)       # N = 1040 rows
    out = jax.block_until_ready(normalization_batch(x, g, b, small_bytes=0, tile_n=128))
    assert out.shape == x.shape
    assert jnp.allclose(out, _reference(x, g, b), atol=1e-4, rtol=1e-4), \
        "streaming path mismatch vs reference"

    print("KERNEL_OK")
</pallas_src>

<mosaic_0001>
module attributes {stable_mosaic.version = 11 : i64} {
  func.func @_small_bn_kernel(%arg0: memref<16x32xf32, #tpu.memory_space<vmem>>, %arg1: memref<1x32xf32, #tpu.memory_space<vmem>>, %arg2: memref<1x32xf32, #tpu.memory_space<vmem>>, %arg3: memref<16x32xf32, #tpu.memory_space<vmem>>) attributes {dimension_semantics = [], scalar_prefetch = 0 : i64, scratch_operands = 0 : i64, tpu.core_type = #tpu.core_type<tc>} {
    %c0 = arith.constant 0 : index
    %c0_0 = arith.constant 0 : index
    %0 = vector.load %arg0[%c0, %c0_0] : memref<16x32xf32, #tpu.memory_space<vmem>>, vector<16x32xf32>
    %cst = arith.constant dense<0.000000e+00> : vector<32xf32>
    %1 = vector.multi_reduction <add>, %0, %cst [0] : vector<16x32xf32> to vector<32xf32>
    %2 = vector.shape_cast %1 : vector<32xf32> to vector<1x32xf32>
    %cst_1 = arith.constant 1.600000e+01 : f32
    %3 = vector.broadcast %cst_1 : f32 to vector<1x32xf32>
    %4 = arith.divf %2, %3 : vector<1x32xf32>
    %5 = vector.broadcast %4 : vector<1x32xf32> to vector<16x32xf32>
    %6 = arith.subf %0, %5 : vector<16x32xf32>
    %7 = arith.mulf %6, %6 : vector<16x32xf32>
    %cst_2 = arith.constant dense<0.000000e+00> : vector<32xf32>
    %8 = vector.multi_reduction <add>, %7, %cst_2 [0] : vector<16x32xf32> to vector<32xf32>
    %9 = vector.shape_cast %8 : vector<32xf32> to vector<1x32xf32>
    %cst_3 = arith.constant 1.600000e+01 : f32
    %10 = vector.broadcast %cst_3 : f32 to vector<1x32xf32>
    %11 = arith.divf %9, %10 : vector<1x32xf32>
    %c0_4 = arith.constant 0 : index
    %c0_5 = arith.constant 0 : index
    %12 = vector.load %arg1[%c0_4, %c0_5] : memref<1x32xf32, #tpu.memory_space<vmem>>, vector<1x32xf32>
    %cst_6 = arith.constant 9.99999974E-6 : f32
    %13 = vector.broadcast %cst_6 : f32 to vector<1x32xf32>
    %14 = arith.addf %11, %13 : vector<1x32xf32>
    %15 = math.rsqrt %14 : vector<1x32xf32>
    %16 = arith.mulf %12, %15 : vector<1x32xf32>
    %17 = vector.broadcast %16 : vector<1x32xf32> to vector<16x32xf32>
    %18 = arith.mulf %6, %17 : vector<16x32xf32>
    %c0_7 = arith.constant 0 : index
    %c0_8 = arith.constant 0 : index
    %19 = vector.load %arg2[%c0_7, %c0_8] : memref<1x32xf32, #tpu.memory_space<vmem>>, vector<1x32xf32>
    %20 = vector.broadcast %19 : vector<1x32xf32> to vector<16x32xf32>
    %21 = arith.addf %18, %20 : vector<16x32xf32>
    %c0_9 = arith.constant 0 : index
    %c0_10 = arith.constant 0 : index
    %22 = vector.load %arg3[%c0_9, %c0_10] : memref<16x32xf32, #tpu.memory_space<vmem>>, vector<16x32xf32>
    tpu.vector_store %arg3[%c0_9, %c0_10], %21 {strides = array<i32>} : memref<16x32xf32, #tpu.memory_space<vmem>>, vector<16x32xf32>,
    return
  }
}

</mosaic_0001>

<llo_original>
// kernel: tpu_custom_call.1
$region0: #{tpu_custom_call.1}
  #allocation0 [shape = 'u32[]', space=smem, size = 0x4, offset = 0x4, fixed_abs, tag = 'smem constant byte address 0x4 - core index']
  #allocation1 [shape = 'u32[144,128]{1,0:T(1,128)}', space=vmem, size = 0x12000, scoped, tag = 'internal scratch']
  %s0 = inlined_call_operand.hbm [shape: f32[16,32], index: 0, kind: input, shape index: {}]
  %s1 = inlined_call_operand.vmem [shape: f32[1,32], index: 1, kind: input, shape index: {}]
  %s2 = inlined_call_operand.vmem [shape: f32[1,32], index: 2, kind: input, shape index: {}]
  %s3 = inlined_call_operand.hbm [shape: f32[16,32], index: 3, kind: output, shape index: {}]
  %s4 = sld [smem:[#allocation0]]
  $region26: #{tpu_custom_call.1} parent=0
    _
  %s6 = ssub.s32 1, %s4
  %s7 = scalar_select 0, %s6, %s4
  $region1: #{tpu_custom_call.1} parent=0
    #allocation2 [shape = 'u8[8192]{0}', space=vmem, size = 0x2000, scoped, tag = 'input window, operand 0, single buffered']
    #allocation3 [shape = 's32[1]{0}', space=sflag, size = 0x4, scoped, tag = 'scoped memory for tpu_custom_call.1']
    #allocation4 [shape = 's32[1]{0}', space=sflag, size = 0x4, scoped, tag = 'scoped memory for tpu_custom_call.1']
    #allocation5 [shape = 'u8[8192]{0}', space=vmem, size = 0x2000, scoped, tag = 'output window, operand 0, single buffered']
    %8 = vsyncpa [#allocation3], 0
    %9 = vsyncpa [#allocation4], 0
    // Predicated region
    $region2: #{tpu_custom_call.1} parent=1 // pred_check
      _
    $region3: #{tpu_custom_call.1} parent=1 // pred_check_branch
      %11 = sbr.rel (0) target = $region5
    $region4: #{tpu_custom_call.1} parent=1 // pred_region
      %s13 = ssub.s32 256, 256
      %14 = vsyncadd [#allocation3], %s13
      %s15 = sshll.u32 [#allocation2], 4
      %s16 = int_to_ptr.vmem [resolvable:$true] %s15
      %21 = dma.hbm_to_vmem [thread:$0]  %s0, 256, %s16, [#allocation3], 128, 128, 8
    $region5: #{tpu_custom_call.1} parent=1 // pred_fallthru
      _
    // Predicated region
    $region6: #{tpu_custom_call.1} parent=1 // pred_check
      _
    $region7: #{tpu_custom_call.1} parent=1 // pred_check_branch
      %23 = sbr.rel (0) target = $region9
    $region8: #{tpu_custom_call.1} parent=1 // pred_region
      _
    $region9: #{tpu_custom_call.1} parent=1 // pred_fallthru
      _
    // Predicated region
    $region10: #{tpu_custom_call.1} parent=1 // pred_check
      _
    $region11: #{tpu_custom_call.1} parent=1 // pred_check_branch
      %25 = sbr.rel (0) target = $region13
    $region12: #{tpu_custom_call.1} parent=1 // pred_region
      _
    $region13: #{tpu_custom_call.1} parent=1 // pred_fallthru
      _
    // Predicated region
    $region14: #{tpu_custom_call.1} parent=1 // pred_check
      _
    $region15: #{tpu_custom_call.1} parent=1 // pred_check_branch
      %27 = sbr.rel (0) target = $region17
    $region16: #{tpu_custom_call.1} parent=1 // pred_region
      %28 = dma.done [#allocation3], 256
    $region17: #{tpu_custom_call.1} parent=1 // pred_fallthru
      _
    %v29 = vld [vmem:[#allocation2] sm:$0xff]
    %v30 = vld [vmem:[#allocation2 + $0x8] sm:$0xff]
    %vm31 = vcmask 261120
    %v32 = vsel %vm31, %v29, 0.0
    %v33 = vsel %vm31, %v30, 0.0
    %v34 = vadd.f32 %v32, %v33
    %v35 = vrot.slane %v34, 4
    %v36 = vadd.f32 %v34, %v35
    %v37 = vrot.slane %v36, 2
    %v38 = vadd.f32 %v36, %v37
    %v39 = vrot.slane %v38, 1
    %v40 = vadd.f32 %v38, %v39
    %v41 = vrcp.pop 16.0
    %v42 = vmul.f32 %v40, %v41
    %v43 = vsub.f32 %v29, %v42
    %v44 = vsub.f32 %v30, %v42
    %v45 = vmul.f32 %v43, %v43
    %v46 = vmul.f32 %v44, %v44
    %v47 = vsel %vm31, %v45, 0.0
    %v48 = vsel %vm31, %v46, 0.0
    %v49 = vadd.f32 %v47, %v48
    %v50 = vrot.slane %v49, 4
    %v51 = vadd.f32 %v49, %v50
    %v52 = vrot.slane %v51, 2
    %v53 = vadd.f32 %v51, %v52
    %v54 = vrot.slane %v53, 1
    %v55 = vadd.f32 %v53, %v54
    %v56 = vmul.f32 %v55, %v41
    %v57 = vld [vmem:[%s1] sm:$0x1]
    %v58 = vadd.f32 %v56, 1e-05
    %v59 = vrsqrt.pop %v58
    %v60 = vmul.f32 %v57, %v59
    %v62 = vlaneseq
    %v63 = vshrl.u32 %v62, 7
    %v64 = vsub.s32 0, %v63
    %v65 = vrot.slane %v60, %v64
    %v67 = vmul.f32 %v43, %v65
    %v68 = vmul.f32 %v44, %v65
    %v69 = vld [vmem:[%s2] sm:$0x1]
    %v71 = vlaneseq
    %v72 = vshrl.u32 %v71, 7
    %v73 = vsub.s32 0, %v72
    %v74 = vrot.slane %v69, %v73
    %v76 = vadd.f32 %v67, %v74
    %v77 = vadd.f32 %v68, %v74
    %78 = vst.msk [vmem:[#allocation5] sm:$0xff] %vm31, %v76
    %79 = vst.msk [vmem:[#allocation5 + $0x8] sm:$0xff] %vm31, %v77
    // Predicated region
    $region18: #{tpu_custom_call.1} parent=1 // pred_check
      _
    $region19: #{tpu_custom_call.1} parent=1 // pred_check_branch
      %81 = sbr.rel (0) target = $region21
    $region20: #{tpu_custom_call.1} parent=1 // pred_region
      %s83 = ssub.s32 256, 256
      %84 = vsyncadd [#allocation4], %s83
      %s85 = sshll.u32 [#allocation5], 4
      %s86 = int_to_ptr.vmem [resolvable:$true] %s85
      %91 = dma.vmem_to_hbm [thread:$0]  %s86, 256, %s3, [#allocation4], 128, 128, 8
    $region21: #{tpu_custom_call.1} parent=1 // pred_fallthru
      _
    // Predicated region
    $region22: #{tpu_custom_call.1} parent=1 // pred_check
      _
    $region23: #{tpu_custom_call.1} parent=1 // pred_check_branch
      %93 = sbr.rel (0) target = $region25
    $region24: #{tpu_custom_call.1} parent=1 // pred_region
      %94 = dma.done [#allocation4], 256
    $region25: #{tpu_custom_call.1} parent=1 // pred_fallthru
      _
    %95 = vsyncpa [#allocation3], 1
    %96 = vsyncpa [#allocation4], 1

</llo_original>
